<compile_context>
chip_gen: v7x
topology: tpu7x:2x2x1
jax: 0.10.0
libtpu: 0.0.40
codegen_flags: <defaults>
</compile_context>

<pallas_src>
import functools

import numpy as np

import jax
import jax.numpy as jnp
from jax.experimental import pallas as pl
from jax.experimental.pallas import tpu as pltpu


# ----------------------------------------------------------------------------
# Interpolation / layout matrices (numpy, cached — built once per shape).
# ----------------------------------------------------------------------------
@functools.lru_cache(maxsize=None)
def _bilinear_matrix_np(out_size, in_size):
    """Row-interpolation matrix matching F.interpolate(mode='bilinear',
    align_corners=False):  out = M @ in  along one spatial axis."""
    scale = in_size / out_size
    dst = np.arange(out_size, dtype=np.float64)
    src = np.maximum((dst + 0.5) * scale - 0.5, 0.0)     # PyTorch clamps negative src to 0
    x0 = np.clip(np.floor(src).astype(np.int64), 0, in_size - 1)
    x1 = np.minimum(x0 + 1, in_size - 1)
    lam = (src - x0).astype(np.float32)
    M = np.zeros((out_size, in_size), np.float32)
    rows = np.arange(out_size)
    M[rows, x0] += 1.0 - lam
    M[rows, x1] += lam
    return M


@functools.lru_cache(maxsize=None)
def _unflatten_mats_np(H, W):
    """0/1 matrices that unflatten a (1, H*W) lane vector into an (H, W) tile
    with MXU/VPU work only (no lane->sublane relayout):
        m2d = (m1 * Bsel) @ Csel,   Bsel[h, j] = [j // W == h],  Csel[j, w] = [j % W == w]."""
    hw = np.arange(H * W)
    csel = (hw[:, None] % W == np.arange(W)[None, :]).astype(np.float32)    # (HW, W)
    bsel = (np.arange(H)[:, None] == (hw[None, :] // W)).astype(np.float32)  # (H, HW)
    return csel, bsel


# ----------------------------------------------------------------------------
# Fused kernel: 1x1 conv -> softmax over channels -> take channel 1 -> bilinear up
# One grid step == one batch element.
# ----------------------------------------------------------------------------
def _fused_seg_kernel(w_ref, b_ref, r_ref, ct_ref, csel_ref, bsel_ref, x_ref, o_ref):
    # w_ref   : (K, C)              bf16   conv weight
    # b_ref   : (K, 1)              f32    conv bias
    # r_ref   : (OUT, H)            bf16   row interpolation matrix
    # ct_ref  : (W, OUT)            bf16   column interpolation matrix (transposed)
    # csel_ref: (HW, W)             bf16   column-select unflatten matrix
    # bsel_ref: (H, HW)             f32    row-select unflatten mask
    # x_ref   : (1, C, HW)          bf16   features, channel-major, flat spatial on lanes
    # o_ref   : (1, 1, OUT, OUT)           is_skin output
    x = x_ref[0]                                                            # (C, HW)

    # 1x1 conv == channel matmul on the MXU, f32 accumulation.
    logits = jnp.dot(w_ref[...], x, preferred_element_type=jnp.float32)     # (K, HW)
    logits = logits + b_ref[...]                                            # (K,1) lane broadcast

    # Vectorized, numerically-stable softmax over the K channel axis.
    mx = jnp.max(logits, axis=0, keepdims=True)                             # (1, HW)
    e = jnp.exp(logits - mx)                                                # (K, HW), one EUP stream
    s = jnp.sum(e, axis=0, keepdims=True)                                   # (1, HW)
    # Only channel 1 is needed downstream; EUP approximate reciprocal for the divide.
    m1 = e[1:2, :] * pl.reciprocal(s, approx=True)                          # (1, HW)

    # Unflatten (1, H*W) -> (H, W): masked sublane broadcast + tiny MXU matmul.
    tmp = (m1 * bsel_ref[...]).astype(jnp.bfloat16)                         # (H, HW)
    m2d = jnp.dot(tmp, csel_ref[...], preferred_element_type=jnp.float32)   # (H, W)

    # Separable bilinear upsample (align_corners=False) as two MXU matmuls,
    # lane-dense intermediate first.
    t = jnp.dot(m2d.astype(jnp.bfloat16), ct_ref[...],
                preferred_element_type=jnp.float32)                         # (H, OUT)
    out = jnp.dot(r_ref[...], t.astype(jnp.bfloat16),
                  preferred_element_type=jnp.float32)                       # (OUT, OUT)
    o_ref[0, 0] = out.astype(o_ref.dtype)


def seg_head_is_skin(x, weight, bias, out_size=256, out_dtype=jnp.float32):
    """x: [B, C, H, W] features; weight: [K, C, 1, 1]; bias: [K].
    Returns softmax(conv2d(x, weight, bias), dim=1)[:, 1:2] bilinearly upsampled
    (align_corners=False) to [B, 1, out_size, out_size] in `out_dtype`
    (f32 matches the PyTorch module; bf16 halves the output DMA if acceptable)."""
    B, C, H, W = x.shape
    K = weight.shape[0]
    HW = H * W

    # bf16 operands everywhere (the MXU on v5e/v6e/v7x takes bf16 natively);
    # all accumulation stays f32 via preferred_element_type.
    xf = x.reshape(B, C, HW).astype(jnp.bfloat16)          # contiguous reshape: free in HBM
    w2 = weight.reshape(K, C).astype(jnp.bfloat16)
    b1 = bias.reshape(K, 1).astype(jnp.float32)
    R = jnp.asarray(_bilinear_matrix_np(out_size, H), jnp.bfloat16)       # (OUT, H)
    CT = jnp.asarray(_bilinear_matrix_np(out_size, W).T, jnp.bfloat16)    # (W, OUT)
    csel_np, bsel_np = _unflatten_mats_np(H, W)
    csel = jnp.asarray(csel_np, jnp.bfloat16)                             # (HW, W)
    bsel = jnp.asarray(bsel_np, jnp.float32)                              # (H, HW)

    out_bytes = int(np.dtype(out_dtype).itemsize)
    flops = 2 * B * (K * C * HW + H * HW * W + H * W * out_size + out_size * H * out_size)
    bytes_accessed = (B * C * HW * 2                       # features (bf16)
                      + B * out_size * out_size * out_bytes  # is_skin output
                      + K * C * 2 + K * 4                  # conv weight + bias
                      + out_size * H * 2 + W * out_size * 2  # R, CT
                      + HW * W * 2 + H * HW * 4)           # csel, bsel

    out = pl.pallas_call(
        _fused_seg_kernel,
        out_shape=jax.ShapeDtypeStruct((B, 1, out_size, out_size), out_dtype),
        grid=(B,),
        in_specs=[
            pl.BlockSpec((K, C), lambda b: (0, 0)),
            pl.BlockSpec((K, 1), lambda b: (0, 0)),
            pl.BlockSpec((out_size, H), lambda b: (0, 0)),
            pl.BlockSpec((W, out_size), lambda b: (0, 0)),
            pl.BlockSpec((HW, W), lambda b: (0, 0)),
            pl.BlockSpec((H, HW), lambda b: (0, 0)),
            pl.BlockSpec((1, C, HW), lambda b: (b, 0, 0)),
        ],
        out_specs=pl.BlockSpec((1, 1, out_size, out_size), lambda b: (b, 0, 0, 0)),
        compiler_params=pltpu.CompilerParams(dimension_semantics=("parallel",)),
        cost_estimate=pl.CostEstimate(flops=flops, transcendentals=B * K * HW,
                                      bytes_accessed=bytes_accessed),
    )(w2, b1, R, CT, csel, bsel, xf)
    return out


# ----------------------------------------------------------------------------
# Pure-JAX reference of the segmentation head (for a loose numerical check).
# ----------------------------------------------------------------------------
def _reference_is_skin(x, weight, bias, out_size=256):
    B, C, H, W = x.shape
    K = weight.shape[0]
    logits = jnp.einsum('kc,bchw->bkhw', weight.reshape(K, C).astype(jnp.float32),
                        x.astype(jnp.float32)) + bias.reshape(1, K, 1, 1)
    mask = jax.nn.softmax(logits, axis=1)
    R = jnp.asarray(_bilinear_matrix_np(out_size, H))
    Cm = jnp.asarray(_bilinear_matrix_np(out_size, W))
    return jnp.einsum('oh,bhw,pw->bop', R, mask[:, 1], Cm)[:, None]


# ----------------------------------------------------------------------------
# Synthetic stand-in for the pretrained StyleGAN2 synthesis network.
# TODO(synk): the pretrained StyleGAN2-ADA generator (loaded from an NVIDIA pickle in the
#             original __init__) has no in-script equivalent; a deterministic plain-JAX
#             stand-in produces `result` and `features` with the right ranks/dtypes.
# ----------------------------------------------------------------------------
def synthetic_synthesis(latents, key, feat_ch=256, feat_hw=16, img_hw=32):
    k1, k2, k3 = jax.random.split(key, 3)
    B = latents.shape[0]
    z = latents.mean(axis=1)                                         # [B, 512]
    Wr = jax.random.normal(k1, (512, 3 * img_hw * img_hw), jnp.float32) * 0.02
    Wc = jax.random.normal(k2, (512, feat_ch), jnp.float32) * 0.05
    Ws = jax.random.normal(k3, (512, feat_hw * feat_hw), jnp.float32) * 0.05
    result = jnp.tanh(z @ Wr).reshape(B, 3, img_hw, img_hw)          # [B, 3, h, w]
    f1 = jnp.einsum('bc,bs->bcs', z @ Wc, z @ Ws).reshape(B, feat_ch, feat_hw, feat_hw)
    features = (result, f1)                                          # features[1]: [B, 256, 16, 16]
    return result, features


# ----------------------------------------------------------------------------
# Decoder.forward equivalent
# ----------------------------------------------------------------------------
def decoder_forward(latents, seg_weight, seg_bias, synth_key):
    result, features = synthetic_synthesis(latents, synth_key)
    # out_dtype=f32 keeps the module's semantics; use jnp.bfloat16 to cut the
    # dominant output DMA if downstream can take a bf16 mask.
    is_skin = seg_head_is_skin(features[1].astype(jnp.float32), seg_weight, seg_bias,
                               out_size=256, out_dtype=jnp.float32)   # [B, 1, 256, 256]
    return result, is_skin, features


if __name__ == "__main__":
    key = jax.random.PRNGKey(0)
    k_lat, k_w, k_b, k_synth = jax.random.split(key, 4)

    B = 2
    latents = jax.random.normal(k_lat, (B, 14, 512), jnp.float32)

    # Segmentation head buffers (shapes from the module: weight [4,256,1,1], bias [4]).
    seg_weight = jax.random.normal(k_w, (4, 256, 1, 1), jnp.float32) * 0.05
    seg_bias = jax.random.normal(k_b, (4,), jnp.float32) * 0.01

    result, is_skin, features = decoder_forward(latents, seg_weight, seg_bias, k_synth)
    jax.block_until_ready((result, is_skin, features))

    assert result.shape == (B, 3, 32, 32)
    assert is_skin.shape == (B, 1, 256, 256)
    assert features[1].shape == (B, 256, 16, 16)
    # softmax channel upsampled with convex weights -> values in ~[0, 1]
    assert float(jnp.min(is_skin)) >= -1e-2 and float(jnp.max(is_skin)) <= 1.0 + 1e-2

    # Loose numerical check vs plain-JAX reference (bf16 operands + approx reciprocal
    # introduce ~1e-3-level deviations).
    ref = _reference_is_skin(features[1].astype(jnp.float32), seg_weight, seg_bias)
    max_err = float(jnp.max(jnp.abs(is_skin.astype(jnp.float32) - ref)))
    assert max_err < 2e-2, f"max abs error vs reference too large: {max_err}"

    print("KERNEL_OK")
</pallas_src>

<mosaic_0001>
module attributes {stable_mosaic.version = 11 : i64} {
  func.func @_fused_seg_kernel(%arg0: i32, %arg1: memref<4x256xbf16, #tpu.memory_space<vmem>>, %arg2: memref<4x1xf32, #tpu.memory_space<vmem>>, %arg3: memref<256x16xbf16, #tpu.memory_space<vmem>>, %arg4: memref<16x256xbf16, #tpu.memory_space<vmem>>, %arg5: memref<256x16xbf16, #tpu.memory_space<vmem>>, %arg6: memref<16x256xf32, #tpu.memory_space<vmem>>, %arg7: memref<1x256x256xbf16, #tpu.memory_space<vmem>>, %arg8: memref<1x1x256x256xf32, #tpu.memory_space<vmem>>) attributes {dimension_semantics = [#tpu.dimension_semantics<parallel>], iteration_bounds = array<i64: 2>, scalar_prefetch = 0 : i64, scratch_operands = 0 : i64, tpu.core_type = #tpu.core_type<tc>, window_params = [{pipeline_mode = #tpu.pipeline_mode<synchronous>, transform_indices = @transform_0, window_bounds = array<i64: 4, 256>}, {pipeline_mode = #tpu.pipeline_mode<synchronous>, transform_indices = @transform_1, window_bounds = array<i64: 4, 1>}, {pipeline_mode = #tpu.pipeline_mode<synchronous>, transform_indices = @transform_2, window_bounds = array<i64: 256, 16>}, {pipeline_mode = #tpu.pipeline_mode<synchronous>, transform_indices = @transform_3, window_bounds = array<i64: 16, 256>}, {pipeline_mode = #tpu.pipeline_mode<synchronous>, transform_indices = @transform_4, window_bounds = array<i64: 256, 16>}, {pipeline_mode = #tpu.pipeline_mode<synchronous>, transform_indices = @transform_5, window_bounds = array<i64: 16, 256>}, {transform_indices = @transform_6, window_bounds = array<i64: 1, 256, 256>}, {transform_indices = @transform_7, window_bounds = array<i64: 1, 1, 256, 256>}]} {
    %c0 = arith.constant 0 : index
    %c0_0 = arith.constant 0 : index
    %c0_1 = arith.constant 0 : index
    %0 = vector.load %arg7[%c0, %c0_0, %c0_1] : memref<1x256x256xbf16, #tpu.memory_space<vmem>>, vector<1x256x256xbf16>
    %1 = vector.shape_cast %0 : vector<1x256x256xbf16> to vector<256x256xbf16>
    %c0_2 = arith.constant 0 : index
    %c0_3 = arith.constant 0 : index
    %2 = vector.load %arg1[%c0_2, %c0_3] : memref<4x256xbf16, #tpu.memory_space<vmem>>, vector<4x256xbf16>
    %cst = arith.constant dense<0.000000e+00> : vector<4x256xf32>
    %3 = tpu.matmul %2, %1, %cst {dimension_numbers = #tpu.dot_dimension_numbers<[1], [0], [0], [1], [0, 0, 1, 1], [], []>} : vector<4x256xbf16>, vector<256x256xbf16>, vector<4x256xf32> -> vector<4x256xf32>
    %c0_4 = arith.constant 0 : index
    %c0_5 = arith.constant 0 : index
    %4 = vector.load %arg2[%c0_4, %c0_5] : memref<4x1xf32, #tpu.memory_space<vmem>>, vector<4x1xf32>
    %5 = vector.broadcast %4 : vector<4x1xf32> to vector<4x256xf32>
    %6 = arith.addf %3, %5 : vector<4x256xf32>
    %cst_6 = arith.constant dense<0xFF800000> : vector<256xf32>
    %7 = vector.multi_reduction <maximumf>, %6, %cst_6 [0] : vector<4x256xf32> to vector<256xf32>
    %8 = vector.shape_cast %7 : vector<256xf32> to vector<1x256xf32>
    %9 = vector.broadcast %8 : vector<1x256xf32> to vector<4x256xf32>
    %10 = arith.subf %6, %9 : vector<4x256xf32>
    %11 = math.exp %10 : vector<4x256xf32>
    %cst_7 = arith.constant dense<0.000000e+00> : vector<256xf32>
    %12 = vector.multi_reduction <add>, %11, %cst_7 [0] : vector<4x256xf32> to vector<256xf32>
    %13 = vector.shape_cast %12 : vector<256xf32> to vector<1x256xf32>
    %14 = vector.extract_strided_slice %11 {offsets = [1, 0], sizes = [1, 256], strides = [1, 1]} : vector<4x256xf32> to vector<1x256xf32>
    %15 = tpu.reciprocal %13 {approx = true} : vector<1x256xf32> -> vector<1x256xf32>
    %16 = arith.mulf %14, %15 : vector<1x256xf32>
    %c0_8 = arith.constant 0 : index
    %c0_9 = arith.constant 0 : index
    %17 = vector.load %arg6[%c0_8, %c0_9] : memref<16x256xf32, #tpu.memory_space<vmem>>, vector<16x256xf32>
    %18 = vector.broadcast %16 : vector<1x256xf32> to vector<16x256xf32>
    %19 = arith.mulf %18, %17 : vector<16x256xf32>
    %20 = arith.truncf %19 : vector<16x256xf32> to vector<16x256xbf16>
    %c0_10 = arith.constant 0 : index
    %c0_11 = arith.constant 0 : index
    %21 = vector.load %arg5[%c0_10, %c0_11] : memref<256x16xbf16, #tpu.memory_space<vmem>>, vector<256x16xbf16>
    %cst_12 = arith.constant dense<0.000000e+00> : vector<16x16xf32>
    %22 = tpu.matmul %20, %21, %cst_12 {dimension_numbers = #tpu.dot_dimension_numbers<[1], [0], [0], [1], [0, 0, 1, 1], [], []>} : vector<16x256xbf16>, vector<256x16xbf16>, vector<16x16xf32> -> vector<16x16xf32>
    %23 = arith.truncf %22 : vector<16x16xf32> to vector<16x16xbf16>
    %c0_13 = arith.constant 0 : index
    %c0_14 = arith.constant 0 : index
    %24 = vector.load %arg4[%c0_13, %c0_14] : memref<16x256xbf16, #tpu.memory_space<vmem>>, vector<16x256xbf16>
    %cst_15 = arith.constant dense<0.000000e+00> : vector<16x256xf32>
    %25 = tpu.matmul %23, %24, %cst_15 {dimension_numbers = #tpu.dot_dimension_numbers<[1], [0], [0], [1], [0, 0, 1, 1], [], []>} : vector<16x16xbf16>, vector<16x256xbf16>, vector<16x256xf32> -> vector<16x256xf32>
    %c0_16 = arith.constant 0 : index
    %c0_17 = arith.constant 0 : index
    %26 = vector.load %arg3[%c0_16, %c0_17] : memref<256x16xbf16, #tpu.memory_space<vmem>>, vector<256x16xbf16>
    %27 = arith.truncf %25 : vector<16x256xf32> to vector<16x256xbf16>
    %cst_18 = arith.constant dense<0.000000e+00> : vector<256x256xf32>
    %28 = tpu.matmul %26, %27, %cst_18 {dimension_numbers = #tpu.dot_dimension_numbers<[1], [0], [0], [1], [0, 0, 1, 1], [], []>} : vector<256x16xbf16>, vector<16x256xbf16>, vector<256x256xf32> -> vector<256x256xf32>
    %c0_19 = arith.constant 0 : index
    %c0_20 = arith.constant 0 : index
    %c0_21 = arith.constant 0 : index
    %c0_22 = arith.constant 0 : index
    %29 = vector.load %arg8[%c0_19, %c0_20, %c0_21, %c0_22] : memref<1x1x256x256xf32, #tpu.memory_space<vmem>>, vector<1x1x256x256xf32>
    %30 = vector.shape_cast %29 : vector<1x1x256x256xf32> to vector<256x256xf32>
    %31 = vector.shape_cast %28 : vector<256x256xf32> to vector<1x1x256x256xf32>
    tpu.vector_store %arg8[%c0_19, %c0_20, %c0_21, %c0_22], %31 {strides = array<i32>} : memref<1x1x256x256xf32, #tpu.memory_space<vmem>>, vector<1x1x256x256xf32>,
    return
  }
  func.func @transform_0(%arg0: i32) -> (i32, i32) {
    %c0_i32 = arith.constant 0 : i32
    %c0_i32_0 = arith.constant 0 : i32
    %c0_i32_1 = arith.constant 0 : i32
    return %c0_i32, %c0_i32_0 : i32, i32
  }
  func.func @transform_1(%arg0: i32) -> (i32, i32) {
    %c0_i32 = arith.constant 0 : i32
    %c0_i32_0 = arith.constant 0 : i32
    %c0_i32_1 = arith.constant 0 : i32
    return %c0_i32, %c0_i32_0 : i32, i32
  }
  func.func @transform_2(%arg0: i32) -> (i32, i32) {
    %c0_i32 = arith.constant 0 : i32
    %c0_i32_0 = arith.constant 0 : i32
    %c0_i32_1 = arith.constant 0 : i32
    return %c0_i32, %c0_i32_0 : i32, i32
  }
  func.func @transform_3(%arg0: i32) -> (i32, i32) {
    %c0_i32 = arith.constant 0 : i32
    %c0_i32_0 = arith.constant 0 : i32
    %c0_i32_1 = arith.constant 0 : i32
    return %c0_i32, %c0_i32_0 : i32, i32
  }
  func.func @transform_4(%arg0: i32) -> (i32, i32) {
    %c0_i32 = arith.constant 0 : i32
    %c0_i32_0 = arith.constant 0 : i32
    %c0_i32_1 = arith.constant 0 : i32
    return %c0_i32, %c0_i32_0 : i32, i32
  }
  func.func @transform_5(%arg0: i32) -> (i32, i32) {
    %c0_i32 = arith.constant 0 : i32
    %c0_i32_0 = arith.constant 0 : i32
    %c0_i32_1 = arith.constant 0 : i32
    return %c0_i32, %c0_i32_0 : i32, i32
  }
  func.func @transform_6(%arg0: i32) -> (i32, i32, i32) {
    %c0_i32 = arith.constant 0 : i32
    %c0_i32_0 = arith.constant 0 : i32
    %c0_i32_1 = arith.constant 0 : i32
    return %arg0, %c0_i32, %c0_i32_0 : i32, i32, i32
  }
  func.func @transform_7(%arg0: i32) -> (i32, i32, i32, i32) {
    %c0_i32 = arith.constant 0 : i32
    %c0_i32_0 = arith.constant 0 : i32
    %c0_i32_1 = arith.constant 0 : i32
    %c0_i32_2 = arith.constant 0 : i32
    return %arg0, %c0_i32, %c0_i32_0, %c0_i32_1 : i32, i32, i32, i32
  }
}

</mosaic_0001>

<llo_original>
// kernel: tpu_custom_call.1
$region0: #{tpu_custom_call.1}
  #allocation0 [shape = 'u32[]', space=smem, size = 0x4, offset = 0x4, fixed_abs, tag = 'smem constant byte address 0x4 - core index']
  #allocation1 [shape = 'u32[144,128]{1,0:T(1,128)}', space=vmem, size = 0x12000, scoped, tag = 'internal scratch']
  %s0 = inlined_call_operand.vmem [shape: bf16[4,256], index: 0, kind: input, shape index: {}]
  %s1 = inlined_call_operand.vmem [shape: f32[4,1], index: 1, kind: input, shape index: {}]
  %s2 = inlined_call_operand.vmem [shape: bf16[256,16], index: 2, kind: input, shape index: {}]
  %s3 = inlined_call_operand.vmem [shape: bf16[16,256], index: 3, kind: input, shape index: {}]
  %s4 = inlined_call_operand.vmem [shape: bf16[256,16], index: 4, kind: input, shape index: {}]
  %s5 = inlined_call_operand.vmem [shape: f32[16,256], index: 5, kind: input, shape index: {}]
  %s6 = inlined_call_operand.hbm [shape: bf16[2,256,256], index: 6, kind: input, shape index: {}]
  %s7 = inlined_call_operand.hbm [shape: f32[2,1,256,256], index: 7, kind: output, shape index: {}]
  %s8 = sld [smem:[#allocation0]]
  $region65: #{tpu_custom_call.1} parent=0
    _
  %s10 = ssub.s32 1, %s8
  %s11 = scalar_select 0, %s10, %s8
  $region1: #{tpu_custom_call.1} parent=0
    #allocation2 [shape = 'u8[262144]{0}', space=vmem, size = 0x40000, scoped, tag = 'input window, operand 6']
    #allocation3 [shape = 's32[2]{0}', space=sflag, size = 0x8, scoped, tag = 'scoped memory for tpu_custom_call.1']
    #allocation4 [shape = 's32[2]{0}', space=sflag, size = 0x8, scoped, tag = 'scoped memory for tpu_custom_call.1']
    #allocation5 [shape = 'u8[524288]{0}', space=vmem, size = 0x80000, scoped, tag = 'output window, operand 0']
    %12 = vsyncpa [#allocation3], 0
    %s13 = scalar_lea.sflag [#allocation3], 1
    %14 = vsyncpa %s13, 0
    %15 = vsyncpa [#allocation4], 0
    %s16 = scalar_lea.sflag [#allocation4], 1
    %17 = vsyncpa %s16, 0
    loop: start=0, step=1, limit=4
    $region2: #{tpu_custom_call.1} parent=1 // loop_pre_header
      _
    $region3: #{tpu_custom_call.1} parent=1 // loop_header
      %s19 = sphi 0, %s23
      %p20 = scmp.ge.s32.totalorder %s19, 4
      %s27 = sphi 0, %s27
      %s29 = sphi 0, %s27
      %s30 = sphi 0, %s29
      %s44 = sphi 0, %s30
      %s48 = sphi 0, %s48
      %s50 = sphi 0, %s48
      %s51 = sphi 0, %s50
      %s65 = sphi 0, %s51
      %s69 = sphi 0, %s69
      %s71 = sphi 0, %s69
      %s72 = sphi 0, %s71
      %s86 = sphi 0, %s72
      %s90 = sphi 0, %s90
      %s92 = sphi 0, %s90
      %s93 = sphi 0, %s92
      %s107 = sphi 0, %s93
      %s111 = sphi 0, %s111
      %s113 = sphi 0, %s111
      %s114 = sphi 0, %s113
      %s128 = sphi 0, %s114
      %s132 = sphi 0, %s132
      %s134 = sphi 0, %s132
      %s135 = sphi 0, %s134
      %s149 = sphi 0, %s135
      %s155 = sphi 0, %s157
      %s158 = sphi 0, %s155
      %s159 = sphi 0, %s158
      %s175 = sphi 0, %s159
      %s181 = sphi 0, %s183
      %s184 = sphi 0, %s181
      %s185 = sphi 0, %s184
      %s201 = sphi 0, %s185
    $region4: #{tpu_custom_call.1} parent=1 // loop_header_branch
      %22 = sbr.rel (%p20) target = $region8
    $region5: #{tpu_custom_call.1} parent=1 // loop_body
      %s24 = ssub.s32 %s19, 1
      %s25 = ssub.s32 %s19, 2
      %s26 = sadd.s32 %s19, 1
      %s28 = sadd.s32 %s27, 1
      %p31 = scmp.eq.s32.totalorder %s19, 1
      %p32 = scmp.ne.s32.totalorder %s27, %s29
      %p33 = scmp.eq.s32.totalorder %s19, 0
      %p34 = por %p32, %p33
      %p35 = scmp.ne.s32.totalorder %s27, %s29
      %p36 = scmp.eq.s32.totalorder %s24, 1
      %p37 = por %p35, %p36
      %p38 = scmp.ne.s32.totalorder %s29, %s30
      %p39 = scmp.eq.s32.totalorder %s24, 0
      %p40 = por %p38, %p39
      %p41 = scmp.ne.s32.totalorder %s29, %s30
      %p42 = scmp.eq.s32.totalorder %s25, 1
      %p43 = por %p41, %p42
      %p45 = scmp.ne.s32.totalorder %s30, %s44
      %p46 = scmp.eq.s32.totalorder %s25, 0
      %p47 = por %p45, %p46
      %s49 = sadd.s32 %s48, 1
      %p52 = scmp.eq.s32.totalorder %s19, 1
      %p53 = scmp.ne.s32.totalorder %s48, %s50
      %p54 = scmp.eq.s32.totalorder %s19, 0
      %p55 = por %p53, %p54
      %p56 = scmp.ne.s32.totalorder %s48, %s50
      %p57 = scmp.eq.s32.totalorder %s24, 1
      %p58 = por %p56, %p57
      %p59 = scmp.ne.s32.totalorder %s50, %s51
      %p60 = scmp.eq.s32.totalorder %s24, 0
      %p61 = por %p59, %p60
      %p62 = scmp.ne.s32.totalorder %s50, %s51
      %p63 = scmp.eq.s32.totalorder %s25, 1
      %p64 = por %p62, %p63
      %p66 = scmp.ne.s32.totalorder %s51, %s65
      %p67 = scmp.eq.s32.totalorder %s25, 0
      %p68 = por %p66, %p67
      %s70 = sadd.s32 %s69, 1
      %p73 = scmp.eq.s32.totalorder %s19, 1
      %p74 = scmp.ne.s32.totalorder %s69, %s71
      %p75 = scmp.eq.s32.totalorder %s19, 0
      %p76 = por %p74, %p75
      %p77 = scmp.ne.s32.totalorder %s69, %s71
      %p78 = scmp.eq.s32.totalorder %s24, 1
      %p79 = por %p77, %p78
      %p80 = scmp.ne.s32.totalorder %s71, %s72
      %p81 = scmp.eq.s32.totalorder %s24, 0
      %p82 = por %p80, %p81
      %p83 = scmp.ne.s32.totalorder %s71, %s72
      %p84 = scmp.eq.s32.totalorder %s25, 1
      %p85 = por %p83, %p84
      %p87 = scmp.ne.s32.totalorder %s72, %s86
      %p88 = scmp.eq.s32.totalorder %s25, 0
      %p89 = por %p87, %p88
      %s91 = sadd.s32 %s90, 1
      %p94 = scmp.eq.s32.totalorder %s19, 1
      %p95 = scmp.ne.s32.totalorder %s90, %s92
      %p96 = scmp.eq.s32.totalorder %s19, 0
      %p97 = por %p95, %p96
      %p98 = scmp.ne.s32.totalorder %s90, %s92
      %p99 = scmp.eq.s32.totalorder %s24, 1
      %p100 = por %p98, %p99
      %p101 = scmp.ne.s32.totalorder %s92, %s93
      %p102 = scmp.eq.s32.totalorder %s24, 0
      %p103 = por %p101, %p102
      %p104 = scmp.ne.s32.totalorder %s92, %s93
      %p105 = scmp.eq.s32.totalorder %s25, 1
      %p106 = por %p104, %p105
      %p108 = scmp.ne.s32.totalorder %s93, %s107
      %p109 = scmp.eq.s32.totalorder %s25, 0
      %p110 = por %p108, %p109
      %s112 = sadd.s32 %s111, 1
      %p115 = scmp.eq.s32.totalorder %s19, 1
      %p116 = scmp.ne.s32.totalorder %s111, %s113
      %p117 = scmp.eq.s32.totalorder %s19, 0
      %p118 = por %p116, %p117
      %p119 = scmp.ne.s32.totalorder %s111, %s113
      %p120 = scmp.eq.s32.totalorder %s24, 1
      %p121 = por %p119, %p120
      %p122 = scmp.ne.s32.totalorder %s113, %s114
      %p123 = scmp.eq.s32.totalorder %s24, 0
      %p124 = por %p122, %p123
      %p125 = scmp.ne.s32.totalorder %s113, %s114
      %p126 = scmp.eq.s32.totalorder %s25, 1
      %p127 = por %p125, %p126
      %p129 = scmp.ne.s32.totalorder %s114, %s128
      %p130 = scmp.eq.s32.totalorder %s25, 0
      %p131 = por %p129, %p130
      %s133 = sadd.s32 %s132, 1
      %p136 = scmp.eq.s32.totalorder %s19, 1
      %p137 = scmp.ne.s32.totalorder %s132, %s134
      %p138 = scmp.eq.s32.totalorder %s19, 0
      %p139 = por %p137, %p138
      %p140 = scmp.ne.s32.totalorder %s132, %s134
      %p141 = scmp.eq.s32.totalorder %s24, 1
      %p142 = por %p140, %p141
      %p143 = scmp.ne.s32.totalorder %s134, %s135
      %p144 = scmp.eq.s32.totalorder %s24, 0
      %p145 = por %p143, %p144
      %p146 = scmp.ne.s32.totalorder %s134, %s135
      %p147 = scmp.eq.s32.totalorder %s25, 1
      %p148 = por %p146, %p147
      %p150 = scmp.ne.s32.totalorder %s135, %s149
      %p151 = scmp.eq.s32.totalorder %s25, 0
      %p152 = por %p150, %p151
      %s153 = ssub.s32 %s19, %s26
      %p154 = scmp.eq.s32.totalorder %s153, 0
      %s156 = sadd.s32 %s155, 1
      %s157 = scalar_select %p154, %s155, %s156
      %p160 = pneg %p154
      %p161 = scmp.eq.s32.totalorder %s19, 1
      %p162 = por %p160, %p161
      %p163 = scmp.ne.s32.totalorder %s155, %s158
      %p164 = scmp.eq.s32.totalorder %s19, 0
      %p165 = por %p163, %p164
      %p166 = scmp.ne.s32.totalorder %s155, %s158
      %p167 = scmp.eq.s32.totalorder %s24, 1
      %p168 = por %p166, %p167
      %p169 = scmp.ne.s32.totalorder %s158, %s159
      %p170 = scmp.eq.s32.totalorder %s24, 0
      %p171 = por %p169, %p170
      %p172 = scmp.ne.s32.totalorder %s158, %s159
      %p173 = scmp.eq.s32.totalorder %s25, 1
      %p174 = por %p172, %p173
      %p176 = scmp.ne.s32.totalorder %s159, %s175
      %p177 = scmp.eq.s32.totalorder %s25, 0
      %p178 = por %p176, %p177
      %s179 = ssub.s32 %s19, %s26
      %p180 = scmp.eq.s32.totalorder %s179, 0
      %s182 = sadd.s32 %s181, 1
      %s183 = scalar_select %p180, %s181, %s182
      %p186 = pneg %p180
      %p187 = scmp.eq.s32.totalorder %s19, 1
      %p188 = por %p186, %p187
      %p189 = scmp.ne.s32.totalorder %s181, %s184
      %p190 = scmp.eq.s32.totalorder %s19, 0
      %p191 = por %p189, %p190
      %p192 = scmp.ne.s32.totalorder %s181, %s184
      %p193 = scmp.eq.s32.totalorder %s24, 1
      %p194 = por %p192, %p193
      %p195 = scmp.ne.s32.totalorder %s184, %s185
      %p196 = scmp.eq.s32.totalorder %s24, 0
      %p197 = por %p195, %p196
      %p198 = scmp.ne.s32.totalorder %s184, %s185
      %p199 = scmp.eq.s32.totalorder %s25, 1
      %p200 = por %p198, %p199
      %p202 = scmp.ne.s32.totalorder %s185, %s201
      %p203 = scmp.eq.s32.totalorder %s25, 0
      %p204 = por %p202, %p203
      %p205 = scmp.le.s32.totalorder 1, %s19
      %p206 = scmp.lt.s32.totalorder %s19, 3
      %p207 = pnand %p205, %p206
      %p208 = pneg %p207
      // Predicated region
      $region9: #{tpu_custom_call.1} parent=5 // pred_check
        _
      $region10: #{tpu_custom_call.1} parent=5 // pred_check_branch
        %210 = sbr.rel (%p207) target = $region12
      $region11: #{tpu_custom_call.1} parent=5 // pred_region
        %s211 = ssub.s32 %s19, 1
        // Predicated region
        $region13: #{tpu_custom_call.1} parent=11 // pred_check
          %p212 = pneg %p40
        $region14: #{tpu_custom_call.1} parent=11 // pred_check_branch
          %214 = sbr.rel (%p212) target = $region16
        $region15: #{tpu_custom_call.1} parent=11 // pred_region
          _
        $region16: #{tpu_custom_call.1} parent=11 // pred_fallthru
          _
        // Predicated region
        $region17: #{tpu_custom_call.1} parent=11 // pred_check
          %p215 = pneg %p61
        $region18: #{tpu_custom_call.1} parent=11 // pred_check_branch
          %217 = sbr.rel (%p215) target = $region20
        $region19: #{tpu_custom_call.1} parent=11 // pred_region
          _
        $region20: #{tpu_custom_call.1} parent=11 // pred_fallthru
          _
        // Predicated region
        $region21: #{tpu_custom_call.1} parent=11 // pred_check
          %p218 = pneg %p82
        $region22: #{tpu_custom_call.1} parent=11 // pred_check_branch
          %220 = sbr.rel (%p218) target = $region24
        $region23: #{tpu_custom_call.1} parent=11 // pred_region
          _
        $region24: #{tpu_custom_call.1} parent=11 // pred_fallthru
          _
        // Predicated region
        $region25: #{tpu_custom_call.1} parent=11 // pred_check
          %p221 = pneg %p103
        $region26: #{tpu_custom_call.1} parent=11 // pred_check_branch
          %223 = sbr.rel (%p221) target = $region28
        $region27: #{tpu_custom_call.1} parent=11 // pred_region
          _
        $region28: #{tpu_custom_call.1} parent=11 // pred_fallthru
          _
        // Predicated region
        $region29: #{tpu_custom_call.1} parent=11 // pred_check
          %p224 = pneg %p124
        $region30: #{tpu_custom_call.1} parent=11 // pred_check_branch
          %226 = sbr.rel (%p224) target = $region32
        $region31: #{tpu_custom_call.1} parent=11 // pred_region
          _
        $region32: #{tpu_custom_call.1} parent=11 // pred_fallthru
          _
        // Predicated region
        $region33: #{tpu_custom_call.1} parent=11 // pred_check
          %p227 = pneg %p145
        $region34: #{tpu_custom_call.1} parent=11 // pred_check_branch
          %229 = sbr.rel (%p227) target = $region36
        $region35: #{tpu_custom_call.1} parent=11 // pred_region
          _
        $region36: #{tpu_custom_call.1} parent=11 // pred_fallthru
          _
      $region12: #{tpu_custom_call.1} parent=5 // pred_fallthru
        _
      %p230 = scmp.lt.s32.totalorder %s19, 2
      // Predicated region
      $region37: #{tpu_custom_call.1} parent=5 // pred_check
        %p231 = pneg %p230
      $region38: #{tpu_custom_call.1} parent=5 // pred_check_branch
        %233 = sbr.rel (%p231) target = $region40
      $region39: #{tpu_custom_call.1} parent=5 // pred_region
        // Predicated region
        $region41: #{tpu_custom_call.1} parent=39 // pred_check
          %p234 = pneg %p165
        $region42: #{tpu_custom_call.1} parent=39 // pred_check_branch
          %236 = sbr.rel (%p234) target = $region44
        $region43: #{tpu_custom_call.1} parent=39 // pred_region
          %s237 = sand.u32 %s155, 1
          %s238 = scalar_lea.sflag [#allocation3], %s237
          %s239 = sand.u32 %s155, 1
          %s240 = smul.addr %s239, 256
          %s241 = scalar_lea.vmem [#allocation2], %s240
          %s243 = ssub.s32 4096, 4096
          %244 = vsyncadd %s238, %s243
          %s245 = smul.addr %s19, 64
          %s246 = smul.addr %s245, 64
          %s247 = scalar_lea.hbm %s6, %s246
          %s248 = sshll.u32 %s241, 4
          %s249 = int_to_ptr.vmem [resolvable:$true] %s248
          %254 = dma.hbm_to_vmem [thread:$0]  %s247, 4096, %s249, %s238, 128, 128, 8
        $region44: #{tpu_custom_call.1} parent=39 // pred_fallthru
          _
      $region40: #{tpu_custom_call.1} parent=5 // pred_fallthru
        _
      %p255 = scmp.le.s32.totalorder 1, %s19
      %p256 = scmp.lt.s32.totalorder %s19, 3
      %p257 = pnand %p255, %p256
      %p258 = pneg %p257
      // Predicated region
      $region45: #{tpu_custom_call.1} parent=5 // pred_check
        _
      $region46: #{tpu_custom_call.1} parent=5 // pred_check_branch
        %260 = sbr.rel (%p257) target = $region48
      $region47: #{tpu_custom_call.1} parent=5 // pred_region
        %s261 = ssub.s32 %s19, 1
        %s262 = sand.u32 %s158, 1
        %s263 = scalar_lea.sflag [#allocation3], %s262
        %s264 = sand.u32 %s158, 1
        %s265 = smul.addr %s264, 256
        %s266 = scalar_lea.vmem [#allocation2], %s265
        // Predicated region
        $region49: #{tpu_custom_call.1} parent=47 // pred_check
          %p267 = pneg %p171
        $region50: #{tpu_custom_call.1} parent=47 // pred_check_branch
          %269 = sbr.rel (%p267) target = $region52
        $region51: #{tpu_custom_call.1} parent=47 // pred_region
          %270 = dma.done %s263, 4096
        $region52: #{tpu_custom_call.1} parent=47 // pred_fallthru
          _
        %p271 = pneg %p40
        %p272 = pneg %p37
        %p273 = pneg %p61
        %p274 = pneg %p58
        %p275 = pneg %p82
        %p276 = pneg %p79
        %p277 = pneg %p103
        %p278 = pneg %p100
        %p279 = pneg %p124
        %p280 = pneg %p121
        %p281 = pneg %p145
        %p282 = pneg %p142
        %s283 = sand.u32 %s158, 1
        %s284 = scalar_lea.sflag [#allocation3], %s283
        %s285 = sand.u32 %s158, 1
        %s286 = smul.addr %s285, 256
        %s287 = scalar_lea.vmem [#allocation2], %s286
        %p288 = pneg %p171
        %p289 = pneg %p168
        %p290 = pneg %p197
        %p291 = pneg %p194
        %s292 = sand.u32 %s184, 1
        %s293 = scalar_lea.sflag [#allocation4], %s292
        %s294 = sand.u32 %s184, 1
        %s295 = smul.addr %s294, 512
        %s296 = scalar_lea.vmem [#allocation5], %s295
        %v298 = vld [vmem:[%s266] sm:$0xff]
        %v299 = vld [vmem:[%s266 + $0x8] sm:$0xff]
        %v300 = vld [vmem:[%s266 + $0x10] sm:$0xff]
        %v301 = vld [vmem:[%s266 + $0x18] sm:$0xff]
        %v302 = vld [vmem:[%s266 + $0x20] sm:$0xff]
        %v303 = vld [vmem:[%s266 + $0x28] sm:$0xff]
        %v304 = vld [vmem:[%s266 + $0x30] sm:$0xff]
        %v305 = vld [vmem:[%s266 + $0x38] sm:$0xff]
        %v306 = vld [vmem:[%s266 + $0x40] sm:$0xff]
        %v307 = vld [vmem:[%s266 + $0x48] sm:$0xff]
        %v308 = vld [vmem:[%s266 + $0x50] sm:$0xff]
        %v309 = vld [vmem:[%s266 + $0x58] sm:$0xff]
        %v310 = vld [vmem:[%s266 + $0x60] sm:$0xff]
        %v311 = vld [vmem:[%s266 + $0x68] sm:$0xff]
        %v312 = vld [vmem:[%s266 + $0x70] sm:$0xff]
        %v313 = vld [vmem:[%s266 + $0x78] sm:$0xff]
        %v314 = vld [vmem:[%s266 + $0x80] sm:$0xff]
        %v315 = vld [vmem:[%s266 + $0x88] sm:$0xff]
        %v316 = vld [vmem:[%s266 + $0x90] sm:$0xff]
        %v317 = vld [vmem:[%s266 + $0x98] sm:$0xff]
        %v318 = vld [vmem:[%s266 + $0xa0] sm:$0xff]
        %v319 = vld [vmem:[%s266 + $0xa8] sm:$0xff]
        %v320 = vld [vmem:[%s266 + $0xb0] sm:$0xff]
        %v321 = vld [vmem:[%s266 + $0xb8] sm:$0xff]
        %v322 = vld [vmem:[%s266 + $0xc0] sm:$0xff]
        %v323 = vld [vmem:[%s266 + $0xc8] sm:$0xff]
        %v324 = vld [vmem:[%s266 + $0xd0] sm:$0xff]
        %v325 = vld [vmem:[%s266 + $0xd8] sm:$0xff]
        %v326 = vld [vmem:[%s266 + $0xe0] sm:$0xff]
        %v327 = vld [vmem:[%s266 + $0xe8] sm:$0xff]
        %v328 = vld [vmem:[%s266 + $0xf0] sm:$0xff]
        %v329 = vld [vmem:[%s266 + $0xf8] sm:$0xff]
        %v330 = vld [vmem:[%s0] sm:$0xf]
        %v331 = vld [vmem:[%s1] sm:$0xf]
        %333 = vset.pattern.permute.xlu0 0
        %334 = vperm.xlu0 %333, %v331
        %v335 = vpop.permute.xlu0 %334
        %v339 = vunpack.c.l.s4 1983009808
        %v340 = vunpack.c.0.s8 %v339
        %v341 = vlaneseq
        %v342 = vshrl.u32 %v341, 7
        %v343 = vsub.s32 %v340, %v342
        %v344 = vrot.slane %v330, %v343
        %v345 = vcombine.high %v344, %v344
        %v380 = vunpack.c.l.b16 %v298
        %v381 = vunpack.c.h.b16 %v298
        %v382 = vunpack.c.l.b16 %v299
        %v383 = vunpack.c.h.b16 %v299
        %v384 = vunpack.c.l.b16 %v300
        %v385 = vunpack.c.h.b16 %v300
        %v386 = vunpack.c.l.b16 %v301
        %v387 = vunpack.c.h.b16 %v301
        %v388 = vunpack.c.l.b16 %v302
        %v389 = vunpack.c.h.b16 %v302
        %v390 = vunpack.c.l.b16 %v303
        %v391 = vunpack.c.h.b16 %v303
        %v392 = vunpack.c.l.b16 %v304
        %v393 = vunpack.c.h.b16 %v304
        %v394 = vunpack.c.l.b16 %v305
        %v395 = vunpack.c.h.b16 %v305
        %v396 = vunpack.c.l.b16 %v306
        %v397 = vunpack.c.h.b16 %v306
        %v398 = vunpack.c.l.b16 %v307
        %v399 = vunpack.c.h.b16 %v307
        %v400 = vunpack.c.l.b16 %v308
        %v401 = vunpack.c.h.b16 %v308
        %v402 = vunpack.c.l.b16 %v309
        %v403 = vunpack.c.h.b16 %v309
        %v404 = vunpack.c.l.b16 %v310
        %v405 = vunpack.c.h.b16 %v310
        %v406 = vunpack.c.l.b16 %v311
        %v407 = vunpack.c.h.b16 %v311
        %v408 = vunpack.c.l.b16 %v312
        %v409 = vunpack.c.h.b16 %v312
        %v410 = vunpack.c.l.b16 %v313
        %v411 = vunpack.c.h.b16 %v313
        %v412 = vunpack.c.l.b16 %v314
        %v413 = vunpack.c.h.b16 %v314
        %v414 = vunpack.c.l.b16 %v315
        %v415 = vunpack.c.h.b16 %v315
        %v416 = vunpack.c.l.b16 %v316
        %v417 = vunpack.c.h.b16 %v316
        %v418 = vunpack.c.l.b16 %v317
        %v419 = vunpack.c.h.b16 %v317
        %v420 = vunpack.c.l.b16 %v318
        %v421 = vunpack.c.h.b16 %v318
        %v422 = vunpack.c.l.b16 %v319
        %v423 = vunpack.c.h.b16 %v319
        %v424 = vunpack.c.l.b16 %v320
        %v425 = vunpack.c.h.b16 %v320
        %v426 = vunpack.c.l.b16 %v321
        %v427 = vunpack.c.h.b16 %v321
        %v428 = vunpack.c.l.b16 %v322
        %v429 = vunpack.c.h.b16 %v322
        %v430 = vunpack.c.l.b16 %v323
        %v431 = vunpack.c.h.b16 %v323
        %v432 = vunpack.c.l.b16 %v324
        %v433 = vunpack.c.h.b16 %v324
        %v434 = vunpack.c.l.b16 %v325
        %v435 = vunpack.c.h.b16 %v325
        %v436 = vunpack.c.l.b16 %v326
        %v437 = vunpack.c.h.b16 %v326
        %v438 = vunpack.c.l.b16 %v327
        %v439 = vunpack.c.h.b16 %v327
        %v440 = vunpack.c.l.b16 %v328
        %v441 = vunpack.c.h.b16 %v328
        %v442 = vunpack.c.l.b16 %v329
        %v443 = vunpack.c.h.b16 %v329
        %v444 = vpack.c.b16 %v382, %v380
        %v445 = vpack.c.b16 %v383, %v381
        %v446 = vpack.c.b16 %v386, %v384
        %v447 = vpack.c.b16 %v387, %v385
        %v448 = vpack.c.b16 %v390, %v388
        %v449 = vpack.c.b16 %v391, %v389
        %v450 = vpack.c.b16 %v394, %v392
        %v451 = vpack.c.b16 %v395, %v393
        %v452 = vpack.c.b16 %v398, %v396
        %v453 = vpack.c.b16 %v399, %v397
        %v454 = vpack.c.b16 %v402, %v400
        %v455 = vpack.c.b16 %v403, %v401
        %v456 = vpack.c.b16 %v406, %v404
        %v457 = vpack.c.b16 %v407, %v405
        %v458 = vpack.c.b16 %v410, %v408
        %v459 = vpack.c.b16 %v411, %v409
        %v460 = vpack.c.b16 %v414, %v412
        %v461 = vpack.c.b16 %v415, %v413
        %v462 = vpack.c.b16 %v418, %v416
        %v463 = vpack.c.b16 %v419, %v417
        %v464 = vpack.c.b16 %v422, %v420
        %v465 = vpack.c.b16 %v423, %v421
        %v466 = vpack.c.b16 %v426, %v424
        %v467 = vpack.c.b16 %v427, %v425
        %v468 = vpack.c.b16 %v430, %v428
        %v469 = vpack.c.b16 %v431, %v429
        %v470 = vpack.c.b16 %v434, %v432
        %v471 = vpack.c.b16 %v435, %v433
        %v472 = vpack.c.b16 %v438, %v436
        %v473 = vpack.c.b16 %v439, %v437
        %v474 = vpack.c.b16 %v442, %v440
        %v475 = vpack.c.b16 %v443, %v441
        %508 = vmatprep.subr.bf16.mxu0 %v445
        %509 = vmatpush1.bf16.msra.mxu0 %v444
        %510 = vmatprep.subr.bf16.mxu0 %v447
        %511 = vmatpush1.bf16.msra.mxu0 %v446
        %512 = vmatprep.subr.bf16.mxu0 %v449
        %513 = vmatpush1.bf16.msra.mxu0 %v448
        %514 = vmatprep.subr.bf16.mxu0 %v451
        %515 = vmatpush1.bf16.msra.mxu0 %v450
        %516 = vmatprep.subr.bf16.mxu0 %v453
        %517 = vmatpush1.bf16.msra.mxu0 %v452
        %518 = vmatprep.subr.bf16.mxu0 %v455
        %519 = vmatpush1.bf16.msra.mxu0 %v454
        %520 = vmatprep.subr.bf16.mxu0 %v457
        %521 = vmatpush1.bf16.msra.mxu0 %v456
        %522 = vmatprep.subr.bf16.mxu0 %v459
        %523 = vmatpush1.bf16.msra.mxu0 %v458
        %524 = vmatprep.subr.bf16.mxu0 %v461
        %525 = vmatpush1.bf16.msra.mxu0 %v460
        %526 = vmatprep.subr.bf16.mxu0 %v463
        %527 = vmatpush1.bf16.msra.mxu0 %v462
        %528 = vmatprep.subr.bf16.mxu0 %v465
        %529 = vmatpush1.bf16.msra.mxu0 %v464
        %530 = vmatprep.subr.bf16.mxu0 %v467
        %531 = vmatpush1.bf16.msra.mxu0 %v466
        %532 = vmatprep.subr.bf16.mxu0 %v469
        %533 = vmatpush1.bf16.msra.mxu0 %v468
        %534 = vmatprep.subr.bf16.mxu0 %v471
        %535 = vmatpush1.bf16.msra.mxu0 %v470
        %536 = vmatprep.subr.bf16.mxu0 %v473
        %537 = vmatpush1.bf16.msra.mxu0 %v472
        %538 = vmatprep.subr.bf16.mxu0 %v475
        %539 = vmatpush1.bf16.msra.mxu0 %v474
        %540 = vmatprep.mubr.bf16.mxu0 %v345
        %541 = vmatmul.mubr.bf16.gmra.mrb[0].mxu0 %v344
        %v542 = vpop.f32.mrb[0].mxu0
        %v543 = vadd.f32 %v335, %v542
        %v544 = vpop.f32.mrb[0].mxu0
        %v545 = vadd.f32 %v335, %v544
        %v546 = vpop.f32.mrb[0].mxu0
        %v547 = vpop.f32.mrb[0].mxu0
        %548 = vdwg.mxu0
        %vm549 = vcmask 1043456
        %v550 = vsel %vm549, %v543, -inf
        %v551 = vrot.slane %v550, 4
        %v552 = vmax.f32 %v550, %v551
        %v553 = vrot.slane %v552, 2
        %v554 = vmax.f32 %v552, %v553
        %v555 = vrot.slane %v554, 1
        %v556 = vmax.f32 %v554, %v555
        %v557 = vsel %vm549, %v545, -inf
        %v558 = vrot.slane %v557, 4
        %v559 = vmax.f32 %v557, %v558
        %v560 = vrot.slane %v559, 2
        %v561 = vmax.f32 %v559, %v560
        %v562 = vrot.slane %v561, 1
        %v563 = vmax.f32 %v561, %v562
        %v564 = vsub.f32 %v543, %v556
        %v565 = vsub.f32 %v545, %v563
        %v566 = vmul.f32 %v564, 1.442695
        %v567 = vpow.pop %v566
        %v568 = vmul.f32 %v565, 1.442695
        %v569 = vpow.pop %v568
        %v570 = vsel %vm549, %v567, 0.0
        %v571 = vrot.slane %v570, 4
        %v572 = vadd.f32 %v570, %v571
        %v573 = vrot.slane %v572, 2
        %v574 = vadd.f32 %v572, %v573
        %v575 = vrot.slane %v574, 1
        %v576 = vadd.f32 %v574, %v575
        %v577 = vsel %vm549, %v569, 0.0
        %v578 = vrot.slane %v577, 4
        %v579 = vadd.f32 %v577, %v578
        %v580 = vrot.slane %v579, 2
        %v581 = vadd.f32 %v579, %v580
        %v582 = vrot.slane %v581, 1
        %v583 = vadd.f32 %v581, %v582
        %v584 = vrcp.pop %v576
        %v585 = vrcp.pop %v583
        %v586 = vmul.f32 %v567, %v584
        %v587 = vmul.f32 %v569, %v585
        %v588 = vld [vmem:[%s5] sm:$0xff]
        %v589 = vld [vmem:[%s5 + $0x8] sm:$0xff]
        %v590 = vld [vmem:[%s5 + $0x10] sm:$0xff]
        %v591 = vld [vmem:[%s5 + $0x18] sm:$0xff]
        %v592 = vlaneseq
        %v593 = vshrl.u32 %v592, 7
        %v594 = vsub.s32 1, %v593
        %v595 = vrot.slane %v586, %v594
        %v596 = vlaneseq
        %v597 = vshrl.u32 %v596, 7
        %v598 = vsub.s32 1, %v597
        %v599 = vrot.slane %v587, %v598
        %v600 = vmul.f32 %v595, %v588
        %v601 = vmul.f32 %v599, %v589
        %v602 = vmul.f32 %v595, %v590
        %v603 = vmul.f32 %v599, %v591
        %v604 = vpack.c.bf16 %v602, %v600
        %v605 = vpack.c.bf16 %v603, %v601
        %v606 = vld [vmem:[%s4] sm:$0xf]
        %v607 = vld [vmem:[%s4 + $0x4] sm:$0xf]
        %v608 = vld [vmem:[%s4 + $0x8] sm:$0xf]
        %v609 = vld [vmem:[%s4 + $0xc] sm:$0xf]
        %v610 = vld [vmem:[%s4 + $0x10] sm:$0xf]
        %v611 = vld [vmem:[%s4 + $0x14] sm:$0xf]
        %v612 = vld [vmem:[%s4 + $0x18] sm:$0xf]
        %v613 = vld [vmem:[%s4 + $0x1c] sm:$0xf]
        %v614 = vld [vmem:[%s4 + $0x20] sm:$0xf]
        %v615 = vld [vmem:[%s4 + $0x24] sm:$0xf]
        %v616 = vld [vmem:[%s4 + $0x28] sm:$0xf]
        %v617 = vld [vmem:[%s4 + $0x2c] sm:$0xf]
        %v618 = vld [vmem:[%s4 + $0x30] sm:$0xf]
        %v619 = vld [vmem:[%s4 + $0x34] sm:$0xf]
        %v620 = vld [vmem:[%s4 + $0x38] sm:$0xf]
        %v621 = vld [vmem:[%s4 + $0x3c] sm:$0xf]
        %v622 = vld [vmem:[%s4 + $0x40] sm:$0xf]
        %v623 = vld [vmem:[%s4 + $0x44] sm:$0xf]
        %v624 = vld [vmem:[%s4 + $0x48] sm:$0xf]
        %v625 = vld [vmem:[%s4 + $0x4c] sm:$0xf]
        %v626 = vld [vmem:[%s4 + $0x50] sm:$0xf]
        %v627 = vld [vmem:[%s4 + $0x54] sm:$0xf]
        %v628 = vld [vmem:[%s4 + $0x58] sm:$0xf]
        %v629 = vld [vmem:[%s4 + $0x5c] sm:$0xf]
        %v630 = vld [vmem:[%s4 + $0x60] sm:$0xf]
        %v631 = vld [vmem:[%s4 + $0x64] sm:$0xf]
        %v632 = vld [vmem:[%s4 + $0x68] sm:$0xf]
        %v633 = vld [vmem:[%s4 + $0x6c] sm:$0xf]
        %v634 = vld [vmem:[%s4 + $0x70] sm:$0xf]
        %v635 = vld [vmem:[%s4 + $0x74] sm:$0xf]
        %v636 = vld [vmem:[%s4 + $0x78] sm:$0xf]
        %v637 = vld [vmem:[%s4 + $0x7c] sm:$0xf]
        %v670 = vunpack.c.l.b16 %v606
        %v671 = vunpack.c.l.b16 %v607
        %v672 = vunpack.c.l.b16 %v608
        %v673 = vunpack.c.l.b16 %v609
        %v674 = vunpack.c.l.b16 %v610
        %v675 = vunpack.c.l.b16 %v611
        %v676 = vunpack.c.l.b16 %v612
        %v677 = vunpack.c.l.b16 %v613
        %v678 = vunpack.c.l.b16 %v614
        %v679 = vunpack.c.l.b16 %v615
        %v680 = vunpack.c.l.b16 %v616
        %v681 = vunpack.c.l.b16 %v617
        %v682 = vunpack.c.l.b16 %v618
        %v683 = vunpack.c.l.b16 %v619
        %v684 = vunpack.c.l.b16 %v620
        %v685 = vunpack.c.l.b16 %v621
        %v686 = vunpack.c.l.b16 %v622
        %v687 = vunpack.c.l.b16 %v623
        %v688 = vunpack.c.l.b16 %v624
        %v689 = vunpack.c.l.b16 %v625
        %v690 = vunpack.c.l.b16 %v626
        %v691 = vunpack.c.l.b16 %v627
        %v692 = vunpack.c.l.b16 %v628
        %v693 = vunpack.c.l.b16 %v629
        %v694 = vunpack.c.l.b16 %v630
        %v695 = vunpack.c.l.b16 %v631
        %v696 = vunpack.c.l.b16 %v632
        %v697 = vunpack.c.l.b16 %v633
        %v698 = vunpack.c.l.b16 %v634
        %v699 = vunpack.c.l.b16 %v635
        %v700 = vunpack.c.l.b16 %v636
        %v701 = vunpack.c.l.b16 %v637
        %v702 = vpack.c.b16 %v671, %v670
        %v703 = vpack.c.b16 %v673, %v672
        %v704 = vpack.c.b16 %v675, %v674
        %v705 = vpack.c.b16 %v677, %v676
        %v706 = vpack.c.b16 %v679, %v678
        %v707 = vpack.c.b16 %v681, %v680
        %v708 = vpack.c.b16 %v683, %v682
        %v709 = vpack.c.b16 %v685, %v684
        %v710 = vpack.c.b16 %v687, %v686
        %v711 = vpack.c.b16 %v689, %v688
        %v712 = vpack.c.b16 %v691, %v690
        %v713 = vpack.c.b16 %v693, %v692
        %v714 = vpack.c.b16 %v695, %v694
        %v715 = vpack.c.b16 %v697, %v696
        %v716 = vpack.c.b16 %v699, %v698
        %v717 = vpack.c.b16 %v701, %v700
        %734 = vmatprep.subr.bf16.mxu0 0
        %735 = vmatpush1.bf16.msra.mxu0 %v702
        %736 = vmatprep.subr.bf16.mxu0 0
        %737 = vmatpush1.bf16.msra.mxu0 %v703
        %738 = vmatprep.subr.bf16.mxu0 0
        %739 = vmatpush1.bf16.msra.mxu0 %v704
        %740 = vmatprep.subr.bf16.mxu0 0
        %741 = vmatpush1.bf16.msra.mxu0 %v705
        %742 = vmatprep.subr.bf16.mxu0 0
        %743 = vmatpush1.bf16.msra.mxu0 %v706
        %744 = vmatprep.subr.bf16.mxu0 0
        %745 = vmatpush1.bf16.msra.mxu0 %v707
        %746 = vmatprep.subr.bf16.mxu0 0
        %747 = vmatpush1.bf16.msra.mxu0 %v708
        %748 = vmatprep.subr.bf16.mxu0 0
        %749 = vmatpush1.bf16.msra.mxu0 %v709
        %750 = vmatprep.subr.bf16.mxu0 0
        %751 = vmatpush1.bf16.msra.mxu0 %v710
        %752 = vmatprep.subr.bf16.mxu0 0
        %753 = vmatpush1.bf16.msra.mxu0 %v711
        %754 = vmatprep.subr.bf16.mxu0 0
        %755 = vmatpush1.bf16.msra.mxu0 %v712
        %756 = vmatprep.subr.bf16.mxu0 0
        %757 = vmatpush1.bf16.msra.mxu0 %v713
        %758 = vmatprep.subr.bf16.mxu0 0
        %759 = vmatpush1.bf16.msra.mxu0 %v714
        %760 = vmatprep.subr.bf16.mxu0 0
        %761 = vmatpush1.bf16.msra.mxu0 %v715
        %762 = vmatprep.subr.bf16.mxu0 0
        %763 = vmatpush1.bf16.msra.mxu0 %v716
        %764 = vmatprep.subr.bf16.mxu0 0
        %765 = vmatpush1.bf16.msra.mxu0 %v717
        %766 = vmatprep.mubr.bf16.mxu0 %v605
        %767 = vmatmul.mubr.bf16.gmra.mrb[0].mxu0 %v604
        %v768 = vpop.f32.mrb[0].mxu0
        %v769 = vadd.f32 0.0, %v768
        %v770 = vpop.f32.mrb[0].mxu0
        %v771 = vpop.f32.mrb[0].mxu0
        %v772 = vadd.f32 0.0, %v771
        %v773 = vpop.f32.mrb[0].mxu0
        %774 = vdwg.mxu0
        %v775 = vpack.c.bf16 %v772, %v769
        %v776 = vld [vmem:[%s3] sm:$0xff]
        %v777 = vld [vmem:[%s3 + $0x8] sm:$0xff]
        %v780 = vunpack.c.l.b16 %v776
        %v781 = vunpack.c.h.b16 %v776
        %v782 = vunpack.c.l.b16 %v777
        %v783 = vunpack.c.h.b16 %v777
        %v784 = vpack.c.b16 %v782, %v780
        %v785 = vpack.c.b16 %v783, %v781
        %vm788 = vcmask 130048
        %v790 = vsel %vm788, %v775, 0
        %792 = vmatprep.subr.bf16.mxu0 %v785
        %793 = vmatpush1.bf16.msra.mxu0 %v784
        %794 = vmatprep.subr.bf16.mxu0 0
        %795 = vmatpush1.bf16.msra.mxu0 0
        %796 = vmatprep.subr.bf16.mxu0 0
        %797 = vmatpush1.bf16.msra.mxu0 0
        %798 = vmatprep.subr.bf16.mxu0 0
        %799 = vmatpush1.bf16.msra.mxu0 0
        %800 = vmatprep.subr.bf16.mxu0 0
        %801 = vmatpush1.bf16.msra.mxu0 0
        %802 = vmatprep.subr.bf16.mxu0 0
        %803 = vmatpush1.bf16.msra.mxu0 0
        %804 = vmatprep.subr.bf16.mxu0 0
        %805 = vmatpush1.bf16.msra.mxu0 0
        %806 = vmatprep.subr.bf16.mxu0 0
        %807 = vmatpush1.bf16.msra.mxu0 0
        %808 = vmatprep.subr.bf16.mxu0 0
        %809 = vmatpush1.bf16.msra.mxu0 0
        %810 = vmatprep.subr.bf16.mxu0 0
        %811 = vmatpush1.bf16.msra.mxu0 0
        %812 = vmatprep.subr.bf16.mxu0 0
        %813 = vmatpush1.bf16.msra.mxu0 0
        %814 = vmatprep.subr.bf16.mxu0 0
        %815 = vmatpush1.bf16.msra.mxu0 0
        %816 = vmatprep.subr.bf16.mxu0 0
        %817 = vmatpush1.bf16.msra.mxu0 0
        %818 = vmatprep.subr.bf16.mxu0 0
        %819 = vmatpush1.bf16.msra.mxu0 0
        %820 = vmatprep.subr.bf16.mxu0 0
        %821 = vmatpush1.bf16.msra.mxu0 0
        %822 = vmatprep.subr.bf16.mxu0 0
        %823 = vmatpush1.bf16.msra.mxu0 0
        %824 = vmatprep.mubr.bf16.mxu0 0
        %825 = vmatmul.mubr.bf16.gmra.mrb[0].mxu0 %v790
        %v826 = vpop.f32.mrb[0].mxu0
        %v827 = vadd.f32 0.0, %v826
        %v828 = vpop.f32.mrb[0].mxu0
        %v829 = vadd.f32 0.0, %v828
        %v830 = vpop.f32.mrb[0].mxu0
        %v831 = vadd.f32 0.0, %v830
        %v832 = vpop.f32.mrb[0].mxu0
        %v833 = vadd.f32 0.0, %v832
        %834 = vdwg.mxu0
        %v835 = vld [vmem:[%s2] sm:$0xf]
        %v836 = vld [vmem:[%s2 + $0x4] sm:$0xf]
        %v837 = vld [vmem:[%s2 + $0x8] sm:$0xf]
        %v838 = vld [vmem:[%s2 + $0xc] sm:$0xf]
        %v839 = vld [vmem:[%s2 + $0x10] sm:$0xf]
        %v840 = vld [vmem:[%s2 + $0x14] sm:$0xf]
        %v841 = vld [vmem:[%s2 + $0x18] sm:$0xf]
        %v842 = vld [vmem:[%s2 + $0x1c] sm:$0xf]
        %v843 = vld [vmem:[%s2 + $0x20] sm:$0xf]
        %v844 = vld [vmem:[%s2 + $0x24] sm:$0xf]
        %v845 = vld [vmem:[%s2 + $0x28] sm:$0xf]
        %v846 = vld [vmem:[%s2 + $0x2c] sm:$0xf]
        %v847 = vld [vmem:[%s2 + $0x30] sm:$0xf]
        %v848 = vld [vmem:[%s2 + $0x34] sm:$0xf]
        %v849 = vld [vmem:[%s2 + $0x38] sm:$0xf]
        %v850 = vld [vmem:[%s2 + $0x3c] sm:$0xf]
        %v851 = vld [vmem:[%s2 + $0x40] sm:$0xf]
        %v852 = vld [vmem:[%s2 + $0x44] sm:$0xf]
        %v853 = vld [vmem:[%s2 + $0x48] sm:$0xf]
        %v854 = vld [vmem:[%s2 + $0x4c] sm:$0xf]
        %v855 = vld [vmem:[%s2 + $0x50] sm:$0xf]
        %v856 = vld [vmem:[%s2 + $0x54] sm:$0xf]
        %v857 = vld [vmem:[%s2 + $0x58] sm:$0xf]
        %v858 = vld [vmem:[%s2 + $0x5c] sm:$0xf]
        %v859 = vld [vmem:[%s2 + $0x60] sm:$0xf]
        %v860 = vld [vmem:[%s2 + $0x64] sm:$0xf]
        %v861 = vld [vmem:[%s2 + $0x68] sm:$0xf]
        %v862 = vld [vmem:[%s2 + $0x6c] sm:$0xf]
        %v863 = vld [vmem:[%s2 + $0x70] sm:$0xf]
        %v864 = vld [vmem:[%s2 + $0x74] sm:$0xf]
        %v865 = vld [vmem:[%s2 + $0x78] sm:$0xf]
        %v866 = vld [vmem:[%s2 + $0x7c] sm:$0xf]
        %v867 = vpack.c.bf16 %v831, %v827
        %v868 = vpack.c.bf16 %v833, %v829
        %v901 = vunpack.c.l.b16 %v835
        %v902 = vunpack.c.l.b16 %v836
        %v903 = vunpack.c.l.b16 %v837
        %v904 = vunpack.c.l.b16 %v838
        %v905 = vunpack.c.l.b16 %v839
        %v906 = vunpack.c.l.b16 %v840
        %v907 = vunpack.c.l.b16 %v841
        %v908 = vunpack.c.l.b16 %v842
        %v909 = vunpack.c.l.b16 %v843
        %v910 = vunpack.c.l.b16 %v844
        %v911 = vunpack.c.l.b16 %v845
        %v912 = vunpack.c.l.b16 %v846
        %v913 = vunpack.c.l.b16 %v847
        %v914 = vunpack.c.l.b16 %v848
        %v915 = vunpack.c.l.b16 %v849
        %v916 = vunpack.c.l.b16 %v850
        %v917 = vunpack.c.l.b16 %v851
        %v918 = vunpack.c.l.b16 %v852
        %v919 = vunpack.c.l.b16 %v853
        %v920 = vunpack.c.l.b16 %v854
        %v921 = vunpack.c.l.b16 %v855
        %v922 = vunpack.c.l.b16 %v856
        %v923 = vunpack.c.l.b16 %v857
        %v924 = vunpack.c.l.b16 %v858
        %v925 = vunpack.c.l.b16 %v859
        %v926 = vunpack.c.l.b16 %v860
        %v927 = vunpack.c.l.b16 %v861
        %v928 = vunpack.c.l.b16 %v862
        %v929 = vunpack.c.l.b16 %v863
        %v930 = vunpack.c.l.b16 %v864
        %v931 = vunpack.c.l.b16 %v865
        %v932 = vunpack.c.l.b16 %v866
        %v933 = vpack.c.b16 %v902, %v901
        %v934 = vpack.c.b16 %v904, %v903
        %v935 = vpack.c.b16 %v906, %v905
        %v936 = vpack.c.b16 %v908, %v907
        %v937 = vpack.c.b16 %v910, %v909
        %v938 = vpack.c.b16 %v912, %v911
        %v939 = vpack.c.b16 %v914, %v913
        %v940 = vpack.c.b16 %v916, %v915
        %v941 = vpack.c.b16 %v918, %v917
        %v942 = vpack.c.b16 %v920, %v919
        %v943 = vpack.c.b16 %v922, %v921
        %v944 = vpack.c.b16 %v924, %v923
        %v945 = vpack.c.b16 %v926, %v925
        %v946 = vpack.c.b16 %v928, %v927
        %v947 = vpack.c.b16 %v930, %v929
        %v948 = vpack.c.b16 %v932, %v931
        %v950 = vsel %vm788, %v933, 0
        %v953 = vsel %vm788, %v934, 0
        %v956 = vsel %vm788, %v935, 0
        %v959 = vsel %vm788, %v936, 0
        %v962 = vsel %vm788, %v937, 0
        %v965 = vsel %vm788, %v938, 0
        %v968 = vsel %vm788, %v939, 0
        %v971 = vsel %vm788, %v940, 0
        %v974 = vsel %vm788, %v941, 0
        %v977 = vsel %vm788, %v942, 0
        %v980 = vsel %vm788, %v943, 0
        %v983 = vsel %vm788, %v944, 0
        %v986 = vsel %vm788, %v945, 0
        %v989 = vsel %vm788, %v946, 0
        %v992 = vsel %vm788, %v947, 0
        %v995 = vsel %vm788, %v948, 0
        %997 = vmatprep.subr.bf16.mxu0 %v868
        %998 = vmatpush1.bf16.msra.mxu0 %v867
        %999 = vmatprep.subr.bf16.mxu0 0
        %1000 = vmatpush1.bf16.msra.mxu0 0
        %1001 = vmatprep.subr.bf16.mxu0 0
        %1002 = vmatpush1.bf16.msra.mxu0 0
        %1003 = vmatprep.subr.bf16.mxu0 0
        %1004 = vmatpush1.bf16.msra.mxu0 0
        %1005 = vmatprep.subr.bf16.mxu0 0
        %1006 = vmatpush1.bf16.msra.mxu0 0
        %1007 = vmatprep.subr.bf16.mxu0 0
        %1008 = vmatpush1.bf16.msra.mxu0 0
        %1009 = vmatprep.subr.bf16.mxu0 0
        %1010 = vmatpush1.bf16.msra.mxu0 0
        %1011 = vmatprep.subr.bf16.mxu0 0
        %1012 = vmatpush1.bf16.msra.mxu0 0
        %1013 = vmatprep.subr.bf16.mxu0 0
        %1014 = vmatpush1.bf16.msra.mxu0 0
        %1015 = vmatprep.subr.bf16.mxu0 0
        %1016 = vmatpush1.bf16.msra.mxu0 0
        %1017 = vmatprep.subr.bf16.mxu0 0
        %1018 = vmatpush1.bf16.msra.mxu0 0
        %1019 = vmatprep.subr.bf16.mxu0 0
        %1020 = vmatpush1.bf16.msra.mxu0 0
        %1021 = vmatprep.subr.bf16.mxu0 0
        %1022 = vmatpush1.bf16.msra.mxu0 0
        %1023 = vmatprep.subr.bf16.mxu0 0
        %1024 = vmatpush1.bf16.msra.mxu0 0
        %1025 = vmatprep.subr.bf16.mxu0 0
        %1026 = vmatpush1.bf16.msra.mxu0 0
        %1027 = vmatprep.subr.bf16.mxu0 0
        %1028 = vmatpush1.bf16.msra.mxu0 0
        %1029 = vmatprep.mubr.bf16.mxu0 0
        %1030 = vmatmul.mubr.bf16.gmra.mrb[0].mxu0 %v950
        %v1031 = vpop.f32.mrb[0].mxu0
        %v1032 = vadd.f32 0.0, %v1031
        %v1033 = vpop.f32.mrb[0].mxu0
        %v1034 = vadd.f32 0.0, %v1033
        %v1035 = vpop.f32.mrb[0].mxu0
        %v1036 = vadd.f32 0.0, %v1035
        %v1037 = vpop.f32.mrb[0].mxu0
        %v1038 = vadd.f32 0.0, %v1037
        %1039 = vmatprep.mubr.bf16.mxu0 0
        %1040 = vmatmul.mubr.bf16.gmra.mrb[0].mxu0 %v953
        %v1041 = vpop.f32.mrb[0].mxu0
        %v1042 = vadd.f32 0.0, %v1041
        %v1043 = vpop.f32.mrb[0].mxu0
        %v1044 = vadd.f32 0.0, %v1043
        %v1045 = vpop.f32.mrb[0].mxu0
        %v1046 = vadd.f32 0.0, %v1045
        %v1047 = vpop.f32.mrb[0].mxu0
        %v1048 = vadd.f32 0.0, %v1047
        %1049 = vmatprep.mubr.bf16.mxu0 0
        %1050 = vmatmul.mubr.bf16.gmra.mrb[0].mxu0 %v956
        %v1051 = vpop.f32.mrb[0].mxu0
        %v1052 = vadd.f32 0.0, %v1051
        %v1053 = vpop.f32.mrb[0].mxu0
        %v1054 = vadd.f32 0.0, %v1053
        %v1055 = vpop.f32.mrb[0].mxu0
        %v1056 = vadd.f32 0.0, %v1055
        %v1057 = vpop.f32.mrb[0].mxu0
        %v1058 = vadd.f32 0.0, %v1057
        %1059 = vmatprep.mubr.bf16.mxu0 0
        %1060 = vmatmul.mubr.bf16.gmra.mrb[0].mxu0 %v959
        %v1061 = vpop.f32.mrb[0].mxu0
        %v1062 = vadd.f32 0.0, %v1061
        %v1063 = vpop.f32.mrb[0].mxu0
        %v1064 = vadd.f32 0.0, %v1063
        %v1065 = vpop.f32.mrb[0].mxu0
        %v1066 = vadd.f32 0.0, %v1065
        %v1067 = vpop.f32.mrb[0].mxu0
        %v1068 = vadd.f32 0.0, %v1067
        %1069 = vmatprep.mubr.bf16.mxu0 0
        %1070 = vmatmul.mubr.bf16.gmra.mrb[0].mxu0 %v962
        %v1071 = vpop.f32.mrb[0].mxu0
        %v1072 = vadd.f32 0.0, %v1071
        %v1073 = vpop.f32.mrb[0].mxu0
        %v1074 = vadd.f32 0.0, %v1073
        %v1075 = vpop.f32.mrb[0].mxu0
        %v1076 = vadd.f32 0.0, %v1075
        %v1077 = vpop.f32.mrb[0].mxu0
        %v1078 = vadd.f32 0.0, %v1077
        %1079 = vmatprep.mubr.bf16.mxu0 0
        %1080 = vmatmul.mubr.bf16.gmra.mrb[0].mxu0 %v965
        %v1081 = vpop.f32.mrb[0].mxu0
        %v1082 = vadd.f32 0.0, %v1081
        %v1083 = vpop.f32.mrb[0].mxu0
        %v1084 = vadd.f32 0.0, %v1083
        %v1085 = vpop.f32.mrb[0].mxu0
        %v1086 = vadd.f32 0.0, %v1085
        %v1087 = vpop.f32.mrb[0].mxu0
        %v1088 = vadd.f32 0.0, %v1087
        %1089 = vmatprep.mubr.bf16.mxu0 0
        %1090 = vmatmul.mubr.bf16.gmra.mrb[0].mxu0 %v968
        %v1091 = vpop.f32.mrb[0].mxu0
        %v1092 = vadd.f32 0.0, %v1091
        %v1093 = vpop.f32.mrb[0].mxu0
        %v1094 = vadd.f32 0.0, %v1093
        %v1095 = vpop.f32.mrb[0].mxu0
        %v1096 = vadd.f32 0.0, %v1095
        %v1097 = vpop.f32.mrb[0].mxu0
        %v1098 = vadd.f32 0.0, %v1097
        %1099 = vmatprep.mubr.bf16.mxu0 0
        %1100 = vmatmul.mubr.bf16.gmra.mrb[0].mxu0 %v971
        %v1101 = vpop.f32.mrb[0].mxu0
        %v1102 = vadd.f32 0.0, %v1101
        %v1103 = vpop.f32.mrb[0].mxu0
        %v1104 = vadd.f32 0.0, %v1103
        %v1105 = vpop.f32.mrb[0].mxu0
        %v1106 = vadd.f32 0.0, %v1105
        %v1107 = vpop.f32.mrb[0].mxu0
        %v1108 = vadd.f32 0.0, %v1107
        %1109 = vmatprep.mubr.bf16.mxu0 0
        %1110 = vmatmul.mubr.bf16.gmra.mrb[0].mxu0 %v974
        %v1111 = vpop.f32.mrb[0].mxu0
        %v1112 = vadd.f32 0.0, %v1111
        %v1113 = vpop.f32.mrb[0].mxu0
        %v1114 = vadd.f32 0.0, %v1113
        %v1115 = vpop.f32.mrb[0].mxu0
        %v1116 = vadd.f32 0.0, %v1115
        %v1117 = vpop.f32.mrb[0].mxu0
        %v1118 = vadd.f32 0.0, %v1117
        %1119 = vmatprep.mubr.bf16.mxu0 0
        %1120 = vmatmul.mubr.bf16.gmra.mrb[0].mxu0 %v977
        %v1121 = vpop.f32.mrb[0].mxu0
        %v1122 = vadd.f32 0.0, %v1121
        %v1123 = vpop.f32.mrb[0].mxu0
        %v1124 = vadd.f32 0.0, %v1123
        %v1125 = vpop.f32.mrb[0].mxu0
        %v1126 = vadd.f32 0.0, %v1125
        %v1127 = vpop.f32.mrb[0].mxu0
        %v1128 = vadd.f32 0.0, %v1127
        %1129 = vmatprep.mubr.bf16.mxu0 0
        %1130 = vmatmul.mubr.bf16.gmra.mrb[0].mxu0 %v980
        %v1131 = vpop.f32.mrb[0].mxu0
        %v1132 = vadd.f32 0.0, %v1131
        %v1133 = vpop.f32.mrb[0].mxu0
        %v1134 = vadd.f32 0.0, %v1133
        %v1135 = vpop.f32.mrb[0].mxu0
        %v1136 = vadd.f32 0.0, %v1135
        %v1137 = vpop.f32.mrb[0].mxu0
        %v1138 = vadd.f32 0.0, %v1137
        %1139 = vmatprep.mubr.bf16.mxu0 0
        %1140 = vmatmul.mubr.bf16.gmra.mrb[0].mxu0 %v983
        %v1141 = vpop.f32.mrb[0].mxu0
        %v1142 = vadd.f32 0.0, %v1141
        %v1143 = vpop.f32.mrb[0].mxu0
        %v1144 = vadd.f32 0.0, %v1143
        %v1145 = vpop.f32.mrb[0].mxu0
        %v1146 = vadd.f32 0.0, %v1145
        %v1147 = vpop.f32.mrb[0].mxu0
        %v1148 = vadd.f32 0.0, %v1147
        %1149 = vmatprep.mubr.bf16.mxu0 0
        %1150 = vmatmul.mubr.bf16.gmra.mrb[0].mxu0 %v986
        %v1151 = vpop.f32.mrb[0].mxu0
        %v1152 = vadd.f32 0.0, %v1151
        %v1153 = vpop.f32.mrb[0].mxu0
        %v1154 = vadd.f32 0.0, %v1153
        %v1155 = vpop.f32.mrb[0].mxu0
        %v1156 = vadd.f32 0.0, %v1155
        %v1157 = vpop.f32.mrb[0].mxu0
        %v1158 = vadd.f32 0.0, %v1157
        %1159 = vmatprep.mubr.bf16.mxu0 0
        %1160 = vmatmul.mubr.bf16.gmra.mrb[0].mxu0 %v989
        %v1161 = vpop.f32.mrb[0].mxu0
        %v1162 = vadd.f32 0.0, %v1161
        %v1163 = vpop.f32.mrb[0].mxu0
        %v1164 = vadd.f32 0.0, %v1163
        %v1165 = vpop.f32.mrb[0].mxu0
        %v1166 = vadd.f32 0.0, %v1165
        %v1167 = vpop.f32.mrb[0].mxu0
        %v1168 = vadd.f32 0.0, %v1167
        %1169 = vmatprep.mubr.bf16.mxu0 0
        %1170 = vmatmul.mubr.bf16.gmra.mrb[0].mxu0 %v992
        %v1171 = vpop.f32.mrb[0].mxu0
        %v1172 = vadd.f32 0.0, %v1171
        %v1173 = vpop.f32.mrb[0].mxu0
        %v1174 = vadd.f32 0.0, %v1173
        %v1175 = vpop.f32.mrb[0].mxu0
        %v1176 = vadd.f32 0.0, %v1175
        %v1177 = vpop.f32.mrb[0].mxu0
        %v1178 = vadd.f32 0.0, %v1177
        %1179 = vmatprep.mubr.bf16.mxu0 0
        %1180 = vmatmul.mubr.bf16.gmra.mrb[0].mxu0 %v995
        %v1181 = vpop.f32.mrb[0].mxu0
        %v1182 = vadd.f32 0.0, %v1181
        %v1183 = vpop.f32.mrb[0].mxu0
        %v1184 = vadd.f32 0.0, %v1183
        %v1185 = vpop.f32.mrb[0].mxu0
        %v1186 = vadd.f32 0.0, %v1185
        %v1187 = vpop.f32.mrb[0].mxu0
        %v1188 = vadd.f32 0.0, %v1187
        %1189 = vdwg.mxu0
        %1190 = vst [vmem:[%s296] sm:$0xff] %v1032
        %1191 = vst [vmem:[%s296 + $0x8] sm:$0xff] %v1034
        %1192 = vst [vmem:[%s296 + $0x10] sm:$0xff] %v1036
        %1193 = vst [vmem:[%s296 + $0x18] sm:$0xff] %v1038
        %1194 = vst [vmem:[%s296 + $0x20] sm:$0xff] %v1042
        %1195 = vst [vmem:[%s296 + $0x28] sm:$0xff] %v1044
        %1196 = vst [vmem:[%s296 + $0x30] sm:$0xff] %v1046
        %1197 = vst [vmem:[%s296 + $0x38] sm:$0xff] %v1048
        %1198 = vst [vmem:[%s296 + $0x40] sm:$0xff] %v1052
        %1199 = vst [vmem:[%s296 + $0x48] sm:$0xff] %v1054
        %1200 = vst [vmem:[%s296 + $0x50] sm:$0xff] %v1056
        %1201 = vst [vmem:[%s296 + $0x58] sm:$0xff] %v1058
        %1202 = vst [vmem:[%s296 + $0x60] sm:$0xff] %v1062
        %1203 = vst [vmem:[%s296 + $0x68] sm:$0xff] %v1064
        %1204 = vst [vmem:[%s296 + $0x70] sm:$0xff] %v1066
        %1205 = vst [vmem:[%s296 + $0x78] sm:$0xff] %v1068
        %1206 = vst [vmem:[%s296 + $0x80] sm:$0xff] %v1072
        %1207 = vst [vmem:[%s296 + $0x88] sm:$0xff] %v1074
        %1208 = vst [vmem:[%s296 + $0x90] sm:$0xff] %v1076
        %1209 = vst [vmem:[%s296 + $0x98] sm:$0xff] %v1078
        %1210 = vst [vmem:[%s296 + $0xa0] sm:$0xff] %v1082
        %1211 = vst [vmem:[%s296 + $0xa8] sm:$0xff] %v1084
        %1212 = vst [vmem:[%s296 + $0xb0] sm:$0xff] %v1086
        %1213 = vst [vmem:[%s296 + $0xb8] sm:$0xff] %v1088
        %1214 = vst [vmem:[%s296 + $0xc0] sm:$0xff] %v1092
        %1215 = vst [vmem:[%s296 + $0xc8] sm:$0xff] %v1094
        %1216 = vst [vmem:[%s296 + $0xd0] sm:$0xff] %v1096
        %1217 = vst [vmem:[%s296 + $0xd8] sm:$0xff] %v1098
        %1218 = vst [vmem:[%s296 + $0xe0] sm:$0xff] %v1102
        %1219 = vst [vmem:[%s296 + $0xe8] sm:$0xff] %v1104
        %1220 = vst [vmem:[%s296 + $0xf0] sm:$0xff] %v1106
        %1221 = vst [vmem:[%s296 + $0xf8] sm:$0xff] %v1108
        %1222 = vst [vmem:[%s296 + $0x100] sm:$0xff] %v1112
        %1223 = vst [vmem:[%s296 + $0x108] sm:$0xff] %v1114
        %1224 = vst [vmem:[%s296 + $0x110] sm:$0xff] %v1116
        %1225 = vst [vmem:[%s296 + $0x118] sm:$0xff] %v1118
        %1226 = vst [vmem:[%s296 + $0x120] sm:$0xff] %v1122
        %1227 = vst [vmem:[%s296 + $0x128] sm:$0xff] %v1124
        %1228 = vst [vmem:[%s296 + $0x130] sm:$0xff] %v1126
        %1229 = vst [vmem:[%s296 + $0x138] sm:$0xff] %v1128
        %1230 = vst [vmem:[%s296 + $0x140] sm:$0xff] %v1132
        %1231 = vst [vmem:[%s296 + $0x148] sm:$0xff] %v1134
        %1232 = vst [vmem:[%s296 + $0x150] sm:$0xff] %v1136
        %1233 = vst [vmem:[%s296 + $0x158] sm:$0xff] %v1138
        %1234 = vst [vmem:[%s296 + $0x160] sm:$0xff] %v1142
        %1235 = vst [vmem:[%s296 + $0x168] sm:$0xff] %v1144
        %1236 = vst [vmem:[%s296 + $0x170] sm:$0xff] %v1146
        %1237 = vst [vmem:[%s296 + $0x178] sm:$0xff] %v1148
        %1238 = vst [vmem:[%s296 + $0x180] sm:$0xff] %v1152
        %1239 = vst [vmem:[%s296 + $0x188] sm:$0xff] %v1154
        %1240 = vst [vmem:[%s296 + $0x190] sm:$0xff] %v1156
        %1241 = vst [vmem:[%s296 + $0x198] sm:$0xff] %v1158
        %1242 = vst [vmem:[%s296 + $0x1a0] sm:$0xff] %v1162
        %1243 = vst [vmem:[%s296 + $0x1a8] sm:$0xff] %v1164
        %1244 = vst [vmem:[%s296 + $0x1b0] sm:$0xff] %v1166
        %1245 = vst [vmem:[%s296 + $0x1b8] sm:$0xff] %v1168
        %1246 = vst [vmem:[%s296 + $0x1c0] sm:$0xff] %v1172
        %1247 = vst [vmem:[%s296 + $0x1c8] sm:$0xff] %v1174
        %1248 = vst [vmem:[%s296 + $0x1d0] sm:$0xff] %v1176
        %1249 = vst [vmem:[%s296 + $0x1d8] sm:$0xff] %v1178
        %1250 = vst [vmem:[%s296 + $0x1e0] sm:$0xff] %v1182
        %1251 = vst [vmem:[%s296 + $0x1e8] sm:$0xff] %v1184
        %1252 = vst [vmem:[%s296 + $0x1f0] sm:$0xff] %v1186
        %1253 = vst [vmem:[%s296 + $0x1f8] sm:$0xff] %v1188
        %s1254 = sand.u32 %s184, 1
        %s1255 = scalar_lea.sflag [#allocation4], %s1254
        %s1256 = sand.u32 %s184, 1
        %s1257 = smul.addr %s1256, 512
        %s1258 = scalar_lea.vmem [#allocation5], %s1257
        // Predicated region
        $region53: #{tpu_custom_call.1} parent=47 // pred_check
          %p1259 = pneg %p194
        $region54: #{tpu_custom_call.1} parent=47 // pred_check_branch
          %1261 = sbr.rel (%p1259) target = $region56
        $region55: #{tpu_custom_call.1} parent=47 // pred_region
          %s1263 = ssub.s32 8192, 8192
          %1264 = vsyncadd %s1255, %s1263
          %s1265 = smul.addr %s24, 64
          %s1266 = smul.addr %s1265, 128
          %s1267 = scalar_lea.hbm %s7, %s1266
          %s1268 = sshll.u32 %s1258, 4
          %s1269 = int_to_ptr.vmem [resolvable:$true] %s1268
          %1274 = dma.vmem_to_hbm [thread:$0]  %s1269, 8192, %s1267, %s1255, 256, 256, 16
        $region56: #{tpu_custom_call.1} parent=47 // pred_fallthru
          _
      $region48: #{tpu_custom_call.1} parent=5 // pred_fallthru
        _
      %p1275 = scmp.le.s32.totalorder 2, %s19
      // Predicated region
      $region57: #{tpu_custom_call.1} parent=5 // pred_check
        %p1276 = pneg %p1275
      $region58: #{tpu_custom_call.1} parent=5 // pred_check_branch
        %1278 = sbr.rel (%p1276) target = $region60
      $region59: #{tpu_custom_call.1} parent=5 // pred_region
        %s1279 = ssub.s32 %s19, 2
        // Predicated region
        $region61: #{tpu_custom_call.1} parent=59 // pred_check
          %p1280 = pneg %p200
        $region62: #{tpu_custom_call.1} parent=59 // pred_check_branch
          %1282 = sbr.rel (%p1280) target = $region64
        $region63: #{tpu_custom_call.1} parent=59 // pred_region
          %s1283 = sand.u32 %s185, 1
          %s1284 = scalar_lea.sflag [#allocation4], %s1283
          %s1285 = sand.u32 %s185, 1
          %s1286 = smul.addr %s1285, 512
          %s1287 = scalar_lea.vmem [#allocation5], %s1286
          %1288 = dma.done %s1284, 8192
        $region64: #{tpu_custom_call.1} parent=59 // pred_fallthru
          _
      $region60: #{tpu_custom_call.1} parent=5 // pred_fallthru
        _
    $region6: #{tpu_custom_call.1} parent=1 // loop_footer
      %s23 = sadd.s32 1, %s19
    $region7: #{tpu_custom_call.1} parent=1 // loop_footer_branch
      %18 = sbr.rel target = $region3
    $region8: #{tpu_custom_call.1} parent=1 // loop_exit
      _
    %1289 = vsyncpa [#allocation3], 1
    %s1290 = scalar_lea.sflag [#allocation3], 1
    %1291 = vsyncpa %s1290, 1
    %1292 = vsyncpa [#allocation4], 1
    %s1293 = scalar_lea.sflag [#allocation4], 1
    %1294 = vsyncpa %s1293, 1

</llo_original>
